<compile_context>
chip_gen: v7x
topology: tpu7x:2x2x1
jax: 0.10.0
libtpu: 0.0.40
codegen_flags: <defaults>
</compile_context>

<pallas_src>
import functools

import jax
import jax.numpy as jnp
from jax.experimental import pallas as pl
from jax.experimental.pallas import tpu as pltpu

_LANE = 128
_TARGET_BLOCK_BYTES = 1 << 20   # ~1 MiB per operand per grid step


# ----------------------------------------------------------------------------
# Shared math (single source of truth for kernel, tail path and reference)
# ----------------------------------------------------------------------------
def _quant_math(x_f32, c, n_levels, dequantize):
    """PACT symmetric weight quantization on f32 values; c is the clip scalar."""
    two_c = 2.0 * c
    y = jnp.minimum(jnp.maximum(x_f32, -c), c)           # clamp to [-c, c]
    q = jnp.round(y * (n_levels / two_c) + 0.5 * n_levels)   # codes in [0, n]
    if dequantize:
        return (q - 0.5 * n_levels) * (two_c / n_levels)  # == 2c * (q/n - 0.5)
    return two_c * (q - 0.5)                              # raw-code affine form


def _pact_weight_quant_kernel(clip_ref, x_ref, o_ref, *, n_levels, dequantize):
    """Elementwise PACT weight quantization on one (block_rows, cols) VMEM tile."""
    c = clip_ref[0]                                       # f32 scalar (SMEM)
    x = x_ref[...].astype(jnp.float32)                    # upcast in-register only
    out = _quant_math(x, c, n_levels, dequantize)
    o_ref[...] = out.astype(o_ref.dtype)


# ----------------------------------------------------------------------------
# Tiling / scheduling helpers
# ----------------------------------------------------------------------------
def _choose_tiling(rows, cols, itemsize):
    """Pick (block_rows, num_blocks) for a (rows, cols) lane-dense slab.

    Targets ~1 MiB blocks, >= 4 grid steps when the tensor allows it (so DMA
    overlaps compute and v7x's two cores both get work), dtype-correct sublane
    multiples, and exact division of `rows` (unmasked full-tile stores).
    """
    sub = max(8, 32 // itemsize)          # f32: 8, bf16: 16, int8/fp8: 32
    if rows < 2 * sub:
        return rows, 1                    # full-extent block: always legal

    bytes_per_row = cols * itemsize
    tgt = max(sub, (_TARGET_BLOCK_BYTES // bytes_per_row) // sub * sub)

    # Prefer at least 4 grid steps (else at least 2) when the tensor is big
    # enough; this is what restores pipelining / dual-core balance on mid-size
    # weight tensors that previously collapsed to a single block.
    cap4 = (rows // 4) // sub * sub
    cap2 = (rows // 2) // sub * sub
    if cap4 >= sub:
        tgt = min(tgt, cap4)
    else:
        tgt = min(tgt, cap2)              # rows >= 2*sub guarantees cap2 >= sub
    tgt = max(tgt, sub)

    block_rows = tgt
    if rows % sub == 0 and rows % block_rows != 0:
        # Search downward (never fewer steps than the target) for an exact
        # divisor; prefer one that yields an even step count, else any divisor.
        lo = max(sub, tgt // 2)
        found = None
        for want_even in (True, False):
            cand = tgt
            while cand >= lo:
                if rows % cand == 0 and ((rows // cand) % 2 == 0 or not want_even):
                    found = cand
                    break
                cand -= sub
            if found is not None:
                break
        if found is not None:
            block_rows = found
    block_rows = min(block_rows, rows)
    num_blocks = pl.cdiv(rows, block_rows)
    return block_rows, num_blocks


def _preferred_dimension_semantics():
    """CORE_PARALLEL on v7x (2 TCs/chip); plain 'parallel' elsewhere."""
    try:
        kind = jax.devices()[0].device_kind.lower()
    except Exception:  # pragma: no cover - defensive
        kind = ""
    if ("v7" in kind or "7x" in kind) and hasattr(pltpu, "CORE_PARALLEL"):
        return (pltpu.CORE_PARALLEL,)
    return ("parallel",)


# ----------------------------------------------------------------------------
# Public wrapper
# ----------------------------------------------------------------------------
def weight_learned_clipped_linear_quantization(x, clip_val, num_bits,
                                               dequantize=True, inplace=False):
    """Pallas-backed forward of Weight_LearnedClippedLinearQuantization."""
    orig_shape = x.shape

    if not jnp.issubdtype(x.dtype, jnp.floating):
        x = x.astype(jnp.float32)
    work_dtype = x.dtype
    itemsize = jnp.dtype(work_dtype).itemsize

    n_levels = float(2 ** num_bits - 1)
    # NOTE: clip_val is a learned parameter; clip_val <= 0 yields inf/NaN, same
    # as the PyTorch reference (no extra guard to keep semantics identical).
    clip_arr = jnp.asarray(clip_val, jnp.float32).reshape(-1)[:1]
    c_scalar = clip_arr[0]

    xf = x.reshape(-1)                     # row-major flatten (no copy)
    total = xf.size
    if total == 0:
        return x.reshape(orig_shape)

    # 128-aligned prefix handled by the kernel; the <128-element tail (rare for
    # weight tensors) is handled with plain jnp -- no full-tensor pad/slice.
    aligned = (total // _LANE) * _LANE
    if aligned == 0:
        out = _quant_math(xf.astype(jnp.float32), c_scalar, n_levels, dequantize)
        return out.astype(work_dtype).reshape(orig_shape)

    head = xf if aligned == total else xf[:aligned]

    # Widest lane-dense column count that divides the aligned element count so
    # the reshape is a pure view and every store is a wide unmasked vst.
    cols = _LANE
    for cand in (1024, 512, 256):
        if aligned % cand == 0:
            cols = cand
            break
    rows = aligned // cols
    x2 = head.reshape(rows, cols)

    block_rows, num_blocks = _choose_tiling(rows, cols, itemsize)

    kernel = functools.partial(
        _pact_weight_quant_kernel, n_levels=n_levels, dequantize=dequantize
    )
    aliases = {1: 0} if (inplace and aligned == total) else {}

    def run(dim_sem):
        return pl.pallas_call(
            kernel,
            out_shape=jax.ShapeDtypeStruct((rows, cols), work_dtype),
            grid=(num_blocks,),
            in_specs=[
                # clip_val (shape (1,)) lives in SMEM, visible to every grid step
                pl.BlockSpec(memory_space=pltpu.MemorySpace.SMEM),
                pl.BlockSpec((block_rows, cols), lambda i: (i, 0)),
            ],
            out_specs=pl.BlockSpec((block_rows, cols), lambda i: (i, 0)),
            input_output_aliases=aliases,
            compiler_params=pltpu.CompilerParams(dimension_semantics=dim_sem),
        )(clip_arr, x2)

    dim_sem = _preferred_dimension_semantics()
    try:
        out2 = run(dim_sem)
    except Exception:
        if dim_sem == ("parallel",):
            raise
        out2 = run(("parallel",))          # safe fallback if CORE_PARALLEL rejects

    out = out2.reshape(-1)
    if aligned != total:
        tail = _quant_math(xf[aligned:].astype(jnp.float32), c_scalar,
                           n_levels, dequantize).astype(work_dtype)
        out = jnp.concatenate([out, tail])
    return out.reshape(orig_shape)


class WeightLearnedClippedLinearQuantization:
    """Thin JAX analogue of the PyTorch nn.Module (forward only)."""

    def __init__(self, num_bits, init_act_clip_val, dequantize=True,
                 inplace=False, CGGrad=False):
        self.num_bits = num_bits
        # nn.Parameter(torch.Tensor([init_act_clip_val])) -> shape (1,) float32
        self.clip_val = jnp.array([float(init_act_clip_val)], jnp.float32)
        self.dequantize = dequantize
        self.inplace = inplace              # mapped to input_output_aliases
        self.CGGrad = CGGrad
        # TODO(synk): STE backward (grad_input / grad_alpha) not implemented;
        # forward only, matching the requested scope.

    def __call__(self, x):
        if self.CGGrad:
            raise ValueError("No CGGread Mode yet")
        return weight_learned_clipped_linear_quantization(
            x, self.clip_val, self.num_bits, self.dequantize, self.inplace
        )


def _reference_forward(x, clip_val, num_bits, dequantize=True):
    """Pure-jnp reference of the PyTorch STE forward.

    Uses the fused form round(clamp(x) * n/(2c) + n/2), algebraically identical
    to the PyTorch sequence round(n * (clamp(x)/(2c) + 0.5)) (they differ only
    in FP rounding of intermediates, never in semantics), so it matches the
    kernel bit-for-bit.
    """
    c = jnp.asarray(clip_val, jnp.float32).reshape(-1)[0]
    n = float(2 ** num_bits - 1)
    out = _quant_math(x.astype(jnp.float32), c, n, dequantize)
    return out.astype(x.dtype)


if __name__ == "__main__":
    key = jax.random.PRNGKey(0)
    module = WeightLearnedClippedLinearQuantization(num_bits=4,
                                                    init_act_clip_val=1.0)

    # --- primary case: small NCHW-shaped f32 tensor -------------------------
    x = jax.random.normal(key, (2, 4, 16, 16), dtype=jnp.float32) * 2.0
    out = jax.block_until_ready(module(x))
    ref = _reference_forward(x, module.clip_val, module.num_bits,
                             module.dequantize)
    assert out.shape == x.shape and out.dtype == x.dtype
    assert jnp.allclose(out, ref, atol=1e-5, rtol=0)
    # outputs must lie on the quantization grid inside [-c, c]
    c0 = float(module.clip_val[0])
    nq = 2 ** module.num_bits - 1
    levels = (out + c0) * nq / (2.0 * c0)
    assert float(jnp.max(jnp.abs(levels - jnp.round(levels)))) < 1e-3
    assert float(jnp.max(jnp.abs(out))) <= c0 + 1e-6

    # --- multi-block grid path (>= 4 pipelined grid steps) ------------------
    x_big = jax.random.normal(jax.random.PRNGKey(1), (8, 16, 16, 16),
                              dtype=jnp.float32)
    out_big = jax.block_until_ready(module(x_big))
    ref_big = _reference_forward(x_big, module.clip_val, module.num_bits,
                                 module.dequantize)
    assert jnp.allclose(out_big, ref_big, atol=1e-5, rtol=0)

    # --- bf16 native-dtype I/O through the kernel ----------------------------
    xb = x.astype(jnp.bfloat16)
    outb = jax.block_until_ready(module(xb))
    refb = _reference_forward(xb, module.clip_val, module.num_bits,
                              module.dequantize)
    assert outb.shape == xb.shape and outb.dtype == jnp.bfloat16
    assert jnp.allclose(outb.astype(jnp.float32), refb.astype(jnp.float32),
                        atol=1e-2, rtol=0)

    # --- ragged size (not a multiple of 128): aligned prefix + jnp tail ------
    xr = jax.random.normal(jax.random.PRNGKey(2), (7, 33), dtype=jnp.float32)
    outr = jax.block_until_ready(module(xr))
    refr = _reference_forward(xr, module.clip_val, module.num_bits,
                              module.dequantize)
    assert outr.shape == xr.shape
    assert jnp.allclose(outr, refr, atol=1e-5, rtol=0)

    print("KERNEL_OK")
</pallas_src>

<mosaic_0001>
module attributes {stable_mosaic.version = 11 : i64} {
  func.func @_pact_weight_quant_kernel(%arg0: i32, %arg1: memref<1xf32, #tpu.memory_space<smem>>, %arg2: memref<2x1024xf32, #tpu.memory_space<vmem>>, %arg3: memref<2x1024xf32, #tpu.memory_space<vmem>>) attributes {dimension_semantics = [#tpu.dimension_semantics<parallel>], iteration_bounds = array<i64: 1>, scalar_prefetch = 0 : i64, scratch_operands = 0 : i64, tpu.core_type = #tpu.core_type<tc>, window_params = [{transform_indices = @transform_0, window_bounds = array<i64: 1>}, {transform_indices = @transform_1, window_bounds = array<i64: 2, 1024>}, {transform_indices = @transform_2, window_bounds = array<i64: 2, 1024>}]} {
    %c0 = arith.constant 0 : index
    %0 = memref.load %arg1[%c0] : memref<1xf32, #tpu.memory_space<smem>>
    %c0_0 = arith.constant 0 : index
    %c0_1 = arith.constant 0 : index
    %1 = vector.load %arg2[%c0_0, %c0_1] : memref<2x1024xf32, #tpu.memory_space<vmem>>, vector<2x1024xf32>
    %cst = arith.constant 2.000000e+00 : f32
    %2 = arith.mulf %cst, %0 : f32
    %cst_2 = arith.constant 0.000000e+00 : f32
    %3 = arith.subf %cst_2, %0 : f32
    %4 = vector.broadcast %3 : f32 to vector<2x1024xf32>
    %5 = arith.maximumf %1, %4 : vector<2x1024xf32>
    %6 = vector.broadcast %0 : f32 to vector<2x1024xf32>
    %7 = arith.minimumf %5, %6 : vector<2x1024xf32>
    %cst_3 = arith.constant 1.500000e+01 : f32
    %8 = arith.divf %cst_3, %2 : f32
    %9 = vector.broadcast %8 : f32 to vector<2x1024xf32>
    %10 = arith.mulf %7, %9 : vector<2x1024xf32>
    %cst_4 = arith.constant 7.500000e+00 : f32
    %11 = vector.broadcast %cst_4 : f32 to vector<2x1024xf32>
    %12 = arith.addf %10, %11 : vector<2x1024xf32>
    %13 = math.roundeven %12 : vector<2x1024xf32>
    %cst_5 = arith.constant 7.500000e+00 : f32
    %14 = vector.broadcast %cst_5 : f32 to vector<2x1024xf32>
    %15 = arith.subf %13, %14 : vector<2x1024xf32>
    %cst_6 = arith.constant 1.500000e+01 : f32
    %16 = arith.divf %2, %cst_6 : f32
    %17 = vector.broadcast %16 : f32 to vector<2x1024xf32>
    %18 = arith.mulf %15, %17 : vector<2x1024xf32>
    %c0_7 = arith.constant 0 : index
    %c0_8 = arith.constant 0 : index
    %19 = vector.load %arg3[%c0_7, %c0_8] : memref<2x1024xf32, #tpu.memory_space<vmem>>, vector<2x1024xf32>
    tpu.vector_store %arg3[%c0_7, %c0_8], %18 {strides = array<i32>} : memref<2x1024xf32, #tpu.memory_space<vmem>>, vector<2x1024xf32>,
    return
  }
  func.func @transform_0(%arg0: i32) -> i32 {
    %c0_i32 = arith.constant 0 : i32
    %c0_i32_0 = arith.constant 0 : i32
    return %c0_i32 : i32
  }
  func.func @transform_1(%arg0: i32) -> (i32, i32) {
    %c0_i32 = arith.constant 0 : i32
    %c0_i32_0 = arith.constant 0 : i32
    return %arg0, %c0_i32 : i32, i32
  }
  func.func @transform_2(%arg0: i32) -> (i32, i32) {
    %c0_i32 = arith.constant 0 : i32
    %c0_i32_0 = arith.constant 0 : i32
    return %arg0, %c0_i32 : i32, i32
  }
}

</mosaic_0001>

<llo_original>
// kernel: tpu_custom_call.1
$region0: #{tpu_custom_call.1}
  #allocation0 [shape = 'u32[]', space=smem, size = 0x4, offset = 0x4, fixed_abs, tag = 'smem constant byte address 0x4 - core index']
  #allocation1 [shape = 'u32[144,128]{1,0:T(1,128)}', space=vmem, size = 0x12000, scoped, tag = 'internal scratch']
  #allocation2 [shape = 'f32[1]{0:T(128)S(6)}', space=smem, size = 0x200, scoped, tag = 'scoped memory for tpu_custom_call.1']
  %s0 = inlined_call_operand.<no memory space> [shape: f32[1], index: 0, kind: input, shape index: {}]
  %s1 = inlined_call_operand.hbm [shape: f32[2,1024], index: 1, kind: input, shape index: {}]
  %s2 = inlined_call_operand.hbm [shape: f32[2,1024], index: 2, kind: output, shape index: {}]
  %s3 = sld [smem:[#allocation0]]
  $region22: #{tpu_custom_call.1} parent=0
    _
  %s5 = ssub.s32 1, %s3
  %s6 = scalar_select 0, %s5, %s3
  %7 = sst [smem:[#allocation2]] %s0
  $region1: #{tpu_custom_call.1} parent=0
    #allocation3 [shape = 'u8[8192]{0}', space=vmem, size = 0x2000, scoped, tag = 'input window, operand 1, single buffered']
    #allocation4 [shape = 's32[1]{0}', space=sflag, size = 0x4, scoped, tag = 'scoped memory for tpu_custom_call.1']
    #allocation5 [shape = 's32[1]{0}', space=sflag, size = 0x4, scoped, tag = 'scoped memory for tpu_custom_call.1']
    #allocation6 [shape = 'u8[8192]{0}', space=vmem, size = 0x2000, scoped, tag = 'output window, operand 0, single buffered']
    %8 = vsyncpa [#allocation4], 0
    %9 = vsyncpa [#allocation5], 0
    // Predicated region
    $region2: #{tpu_custom_call.1} parent=1 // pred_check
      _
    $region3: #{tpu_custom_call.1} parent=1 // pred_check_branch
      %11 = sbr.rel (0) target = $region5
    $region4: #{tpu_custom_call.1} parent=1 // pred_region
      _
    $region5: #{tpu_custom_call.1} parent=1 // pred_fallthru
      _
    // Predicated region
    $region6: #{tpu_custom_call.1} parent=1 // pred_check
      _
    $region7: #{tpu_custom_call.1} parent=1 // pred_check_branch
      %13 = sbr.rel (0) target = $region9
    $region8: #{tpu_custom_call.1} parent=1 // pred_region
      %s15 = ssub.s32 256, 256
      %16 = vsyncadd [#allocation4], %s15
      %s18 = sshll.u32 [#allocation3], 4
      %s19 = int_to_ptr.vmem [resolvable:$true] %s18
      %21 = dma.hbm_to_vmem [thread:$0]  %s1, 256, %s19, [#allocation4]
    $region9: #{tpu_custom_call.1} parent=1 // pred_fallthru
      _
    // Predicated region
    $region10: #{tpu_custom_call.1} parent=1 // pred_check
      _
    $region11: #{tpu_custom_call.1} parent=1 // pred_check_branch
      %23 = sbr.rel (0) target = $region13
    $region12: #{tpu_custom_call.1} parent=1 // pred_region
      %24 = dma.done [#allocation4], 256
    $region13: #{tpu_custom_call.1} parent=1 // pred_fallthru
      _
    %s25 = sld [smem:[#allocation2]]
    %v26 = vld [vmem:[#allocation3] sm:$0xff]
    %v27 = vld [vmem:[#allocation3 + $0x8] sm:$0xff]
    %s28 = smul.f32 %s25, 2.0
    %s29 = ssub.f32 0.0, %s25
    %v30 = vstv %s29
    %v31 = vmax.f32 %v26, %v30
    %v32 = vmax.f32 %v27, %v30
    %v33 = vstv %s25
    %v34 = vmin.f32 %v31, %v33
    %v35 = vmin.f32 %v32, %v33
    %v36 = vstv %s28
    %v37 = vrcp.pop %v36
    %s38 = vtos %v37
    %s39 = smul.f32 15.0, %s38
    %v40 = vstv %s39
    %v41 = vmul.f32 %v34, %v40
    %v42 = vmul.f32 %v35, %v40
    %v43 = vadd.f32 %v41, 7.5
    %v44 = vadd.f32 %v42, 7.5
    %v45 = vround.ne.pseudo %v43
    %v46 = vround.ne.pseudo %v44
    %v47 = vsub.f32 %v45, 7.5
    %v48 = vsub.f32 %v46, 7.5
    %v49 = vrcp.pop 15.0
    %s50 = vtos %v49
    %s51 = smul.f32 %s28, %s50
    %v52 = vstv %s51
    %v53 = vmul.f32 %v47, %v52
    %v54 = vmul.f32 %v48, %v52
    %55 = vst [vmem:[#allocation6] sm:$0xff] %v53
    %56 = vst [vmem:[#allocation6 + $0x8] sm:$0xff] %v54
    // Predicated region
    $region14: #{tpu_custom_call.1} parent=1 // pred_check
      _
    $region15: #{tpu_custom_call.1} parent=1 // pred_check_branch
      %58 = sbr.rel (0) target = $region17
    $region16: #{tpu_custom_call.1} parent=1 // pred_region
      %s60 = ssub.s32 256, 256
      %61 = vsyncadd [#allocation5], %s60
      %s63 = sshll.u32 [#allocation6], 4
      %s64 = int_to_ptr.vmem [resolvable:$true] %s63
      %66 = dma.vmem_to_hbm [thread:$0]  %s64, 256, %s2, [#allocation5]
    $region17: #{tpu_custom_call.1} parent=1 // pred_fallthru
      _
    // Predicated region
    $region18: #{tpu_custom_call.1} parent=1 // pred_check
      _
    $region19: #{tpu_custom_call.1} parent=1 // pred_check_branch
      %68 = sbr.rel (0) target = $region21
    $region20: #{tpu_custom_call.1} parent=1 // pred_region
      %69 = dma.done [#allocation5], 256
    $region21: #{tpu_custom_call.1} parent=1 // pred_fallthru
      _
    %70 = vsyncpa [#allocation4], 1
    %71 = vsyncpa [#allocation5], 1

</llo_original>
